<compile_context>
chip_gen: v6e
topology: v6e:2x2x1
jax: 0.10.0
libtpu: 0.0.40
codegen_flags: <defaults>
</compile_context>

<pallas_src>
import jax
import jax.numpy as jnp
from jax.experimental import pallas as pl
from jax.experimental.pallas import tpu as pltpu


def extra_layers_kernel(x_ref, w1_ref, b1_ref, w2_ref, b2_ref, w3_ref, b3_ref,
                        o_ref):
    # x_ref: (bn, C_in, tile_p) -- channels on sublanes, pixels on lanes.
    # Weights arrive already cast to bf16; biases are (c, 1) f32 columns that
    # broadcast over the pixel (lane) axis.
    w1 = w1_ref[...]
    w2 = w2_ref[...]
    w3 = w3_ref[...]
    b1 = b1_ref[...]
    b2 = b2_ref[...]
    b3 = b3_ref[...]

    bn = x_ref.shape[0]           # static (block shape)
    for b in range(bn):           # small static unroll (bn is 1 or N)
        xb = x_ref[b].astype(jnp.bfloat16)                      # (C_in, tile_p)
        # layer_first (1x1 conv == channel matmul) + ReLU
        h1 = jnp.dot(w1, xb, preferred_element_type=jnp.float32) + b1
        h1 = jnp.maximum(h1, 0.0).astype(jnp.bfloat16)
        # layer_2 + ReLU
        h2 = jnp.dot(w2, h1, preferred_element_type=jnp.float32) + b2
        h2 = jnp.maximum(h2, 0.0).astype(jnp.bfloat16)
        # layer_last (no activation)
        out = jnp.dot(w3, h2, preferred_element_type=jnp.float32) + b3
        o_ref[b] = out.astype(o_ref.dtype)


def extra_layers_forward(x_nchw, w1, b1, w2, b2, w3, b3, *, tile_p=1024):
    """x_nchw: (N, C_in, H, W).  w*: (out_c, in_c) squeezed 1x1-conv weights."""
    N, C_in, H, W = x_nchw.shape
    c1, c2, c_out = w1.shape[0], w2.shape[0], w3.shape[0]
    HW = H * W
    out_dtype = x_nchw.dtype

    # free, contiguous reshape -- no transpose, no extra HBM traffic
    x3d = x_nchw.reshape(N, C_in, HW)

    # pixel tile on the lane axis: round DOWN to a multiple of 128
    # (never expand to full HW -- keeps pipelining / vreg pressure sane)
    tile_p = max(128, (min(tile_p, HW) // 128) * 128)

    # pad the pixel axis so every tile is full -> lane-dense unmasked stores
    n_pt = -(-HW // tile_p)
    HW_pad = n_pt * tile_p
    if HW_pad != HW:
        x3d = jnp.pad(x3d, ((0, 0), (0, 0), (0, HW_pad - HW)))

    # collapse the batch into a single grid step when everything fits one tile
    # (kills the ~0.35us/step overhead that dominates tiny problem sizes)
    if n_pt == 1 and N * tile_p <= 4096:
        bn = N
    else:
        bn = 1
    n_bt = N // bn  # bn is 1 or N, so this is exact

    # bf16 operands for the MXU; biases stay f32 (added to f32 accumulators)
    w1b = w1.astype(jnp.bfloat16)
    w2b = w2.astype(jnp.bfloat16)
    w3b = w3.astype(jnp.bfloat16)
    b1c = b1.reshape(c1, 1).astype(jnp.float32)
    b2c = b2.reshape(c2, 1).astype(jnp.float32)
    b3c = b3.reshape(c_out, 1).astype(jnp.float32)

    out3d = pl.pallas_call(
        extra_layers_kernel,
        out_shape=jax.ShapeDtypeStruct((N, c_out, HW_pad), out_dtype),
        grid=(n_bt, n_pt),
        in_specs=[
            pl.BlockSpec((bn, C_in, tile_p), lambda n, p: (n, 0, p)),  # x tile
            pl.BlockSpec((c1, C_in), lambda n, p: (0, 0)),             # W1 (bf16)
            pl.BlockSpec((c1, 1), lambda n, p: (0, 0)),                # b1
            pl.BlockSpec((c2, c1), lambda n, p: (0, 0)),               # W2 (bf16)
            pl.BlockSpec((c2, 1), lambda n, p: (0, 0)),                # b2
            pl.BlockSpec((c_out, c2), lambda n, p: (0, 0)),            # W3 (bf16)
            pl.BlockSpec((c_out, 1), lambda n, p: (0, 0)),             # b3
        ],
        out_specs=pl.BlockSpec((bn, c_out, tile_p), lambda n, p: (n, 0, p)),
        compiler_params=pltpu.CompilerParams(
            dimension_semantics=("parallel", "parallel")),
    )(x3d, w1b, b1c, w2b, b2c, w3b, b3c)

    if HW_pad != HW:
        out3d = out3d[:, :, :HW]

    # free reshape back to NCHW
    return out3d.reshape(N, c_out, H, W)


def xavier_normal(key, out_c, in_c, dtype=jnp.float32):
    # nn.init.xavier_normal_ on a (out_c, in_c, 1, 1) conv weight:
    # std = sqrt(2 / (fan_in + fan_out)), fan = channels * 1 * 1
    std = jnp.sqrt(2.0 / (in_c + out_c)).astype(dtype)
    return jax.random.normal(key, (out_c, in_c), dtype=dtype) * std


def reference_forward(x_nchw, w1, b1, w2, b2, w3, b3):
    # pure-JAX f32 reference of the 1x1-conv stack (NCHW)
    def conv1x1(x, w, b):
        y = jnp.einsum('nchw,oc->nohw', x, w, precision=jax.lax.Precision.HIGHEST)
        return y + b[None, :, None, None]
    h = jax.nn.relu(conv1x1(x_nchw, w1, b1))
    h = jax.nn.relu(conv1x1(h, w2, b2))
    return conv1x1(h, w3, b3)


# TODO(synk): only forward() is implemented; the 'transparent' init path
# (_init_weight / _trans_init_last_layer, pinverse-based) is init-time host
# code and is not ported to Pallas.

if __name__ == "__main__":
    # args: num_classes=4, out_channel_list=[8, 16, 4], enable_activation=True,
    #       enable_bias=True, init_mode='xv' (extend_factor=1)
    num_classes = 4
    out_channel_list = [8, 16, 4]

    N, H, W = 2, 16, 16
    key = jax.random.PRNGKey(0)
    kx, k1, k2, k3, kb1, kb2, kb3 = jax.random.split(key, 7)

    x = jax.random.normal(kx, (N, num_classes, H, W), dtype=jnp.float32)

    # layer_first: num_classes -> c0 ; layer_2: c0 -> c1 ; layer_last: c1 -> c2
    w1 = xavier_normal(k1, out_channel_list[0], num_classes)
    w2 = xavier_normal(k2, out_channel_list[1], out_channel_list[0])
    w3 = xavier_normal(k3, out_channel_list[2], out_channel_list[1])
    # nonzero biases so the bias-broadcast path is actually validated
    # ('xv' init zeros them, but forward semantics are parametric in the bias)
    b1 = 0.1 * jax.random.normal(kb1, (out_channel_list[0],), jnp.float32)
    b2 = 0.1 * jax.random.normal(kb2, (out_channel_list[1],), jnp.float32)
    b3 = 0.1 * jax.random.normal(kb3, (out_channel_list[2],), jnp.float32)

    out = extra_layers_forward(x, w1, b1, w2, b2, w3, b3)
    out = jax.block_until_ready(out)

    ref = reference_forward(x, w1, b1, w2, b2, w3, b3)
    assert out.shape == (N, out_channel_list[2], H, W)
    # bf16 MXU operands (f32 accumulation) => relaxed tolerance vs f32 reference
    assert jnp.allclose(out, ref, atol=5e-2, rtol=5e-2), "mismatch vs reference"

    print("KERNEL_OK")
</pallas_src>

<mosaic_0001>
module attributes {stable_mosaic.version = 11 : i64} {
  func.func @extra_layers_kernel(%arg0: i32, %arg1: i32, %arg2: memref<2x4x256xf32, #tpu.memory_space<vmem>>, %arg3: memref<8x4xbf16, #tpu.memory_space<vmem>>, %arg4: memref<8x1xf32, #tpu.memory_space<vmem>>, %arg5: memref<16x8xbf16, #tpu.memory_space<vmem>>, %arg6: memref<16x1xf32, #tpu.memory_space<vmem>>, %arg7: memref<4x16xbf16, #tpu.memory_space<vmem>>, %arg8: memref<4x1xf32, #tpu.memory_space<vmem>>, %arg9: memref<2x4x256xf32, #tpu.memory_space<vmem>>) attributes {dimension_semantics = [#tpu.dimension_semantics<parallel>, #tpu.dimension_semantics<parallel>], iteration_bounds = array<i64: 1, 1>, scalar_prefetch = 0 : i64, scratch_operands = 0 : i64, tpu.core_type = #tpu.core_type<tc>, window_params = [{transform_indices = @transform_0, window_bounds = array<i64: 2, 4, 256>}, {pipeline_mode = #tpu.pipeline_mode<synchronous>, transform_indices = @transform_1, window_bounds = array<i64: 8, 4>}, {pipeline_mode = #tpu.pipeline_mode<synchronous>, transform_indices = @transform_2, window_bounds = array<i64: 8, 1>}, {pipeline_mode = #tpu.pipeline_mode<synchronous>, transform_indices = @transform_3, window_bounds = array<i64: 16, 8>}, {pipeline_mode = #tpu.pipeline_mode<synchronous>, transform_indices = @transform_4, window_bounds = array<i64: 16, 1>}, {pipeline_mode = #tpu.pipeline_mode<synchronous>, transform_indices = @transform_5, window_bounds = array<i64: 4, 16>}, {pipeline_mode = #tpu.pipeline_mode<synchronous>, transform_indices = @transform_6, window_bounds = array<i64: 4, 1>}, {transform_indices = @transform_7, window_bounds = array<i64: 2, 4, 256>}]} {
    %c0 = arith.constant 0 : index
    %c0_0 = arith.constant 0 : index
    %0 = vector.load %arg3[%c0, %c0_0] : memref<8x4xbf16, #tpu.memory_space<vmem>>, vector<8x4xbf16>
    %c0_1 = arith.constant 0 : index
    %c0_2 = arith.constant 0 : index
    %1 = vector.load %arg5[%c0_1, %c0_2] : memref<16x8xbf16, #tpu.memory_space<vmem>>, vector<16x8xbf16>
    %c0_3 = arith.constant 0 : index
    %c0_4 = arith.constant 0 : index
    %2 = vector.load %arg7[%c0_3, %c0_4] : memref<4x16xbf16, #tpu.memory_space<vmem>>, vector<4x16xbf16>
    %c0_5 = arith.constant 0 : index
    %c0_6 = arith.constant 0 : index
    %3 = vector.load %arg4[%c0_5, %c0_6] : memref<8x1xf32, #tpu.memory_space<vmem>>, vector<8x1xf32>
    %c0_7 = arith.constant 0 : index
    %c0_8 = arith.constant 0 : index
    %4 = vector.load %arg6[%c0_7, %c0_8] : memref<16x1xf32, #tpu.memory_space<vmem>>, vector<16x1xf32>
    %c0_9 = arith.constant 0 : index
    %c0_10 = arith.constant 0 : index
    %5 = vector.load %arg8[%c0_9, %c0_10] : memref<4x1xf32, #tpu.memory_space<vmem>>, vector<4x1xf32>
    %c0_11 = arith.constant 0 : index
    %c0_12 = arith.constant 0 : index
    %c0_13 = arith.constant 0 : index
    %6 = vector.load %arg2[%c0_11, %c0_12, %c0_13] : memref<2x4x256xf32, #tpu.memory_space<vmem>>, vector<1x4x256xf32>
    %7 = vector.shape_cast %6 : vector<1x4x256xf32> to vector<4x256xf32>
    %8 = arith.truncf %7 : vector<4x256xf32> to vector<4x256xbf16>
    %cst = arith.constant dense<0.000000e+00> : vector<8x256xf32>
    %9 = tpu.matmul %0, %8, %cst {dimension_numbers = #tpu.dot_dimension_numbers<[1], [0], [0], [1], [0, 0, 1, 1], [], []>} : vector<8x4xbf16>, vector<4x256xbf16>, vector<8x256xf32> -> vector<8x256xf32>
    %10 = vector.broadcast %3 : vector<8x1xf32> to vector<8x256xf32>
    %11 = arith.addf %9, %10 : vector<8x256xf32>
    %cst_14 = arith.constant 0.000000e+00 : f32
    %12 = vector.broadcast %cst_14 : f32 to vector<8x256xf32>
    %13 = arith.maximumf %11, %12 : vector<8x256xf32>
    %14 = arith.truncf %13 : vector<8x256xf32> to vector<8x256xbf16>
    %cst_15 = arith.constant dense<0.000000e+00> : vector<16x256xf32>
    %15 = tpu.matmul %1, %14, %cst_15 {dimension_numbers = #tpu.dot_dimension_numbers<[1], [0], [0], [1], [0, 0, 1, 1], [], []>} : vector<16x8xbf16>, vector<8x256xbf16>, vector<16x256xf32> -> vector<16x256xf32>
    %16 = vector.broadcast %4 : vector<16x1xf32> to vector<16x256xf32>
    %17 = arith.addf %15, %16 : vector<16x256xf32>
    %cst_16 = arith.constant 0.000000e+00 : f32
    %18 = vector.broadcast %cst_16 : f32 to vector<16x256xf32>
    %19 = arith.maximumf %17, %18 : vector<16x256xf32>
    %20 = arith.truncf %19 : vector<16x256xf32> to vector<16x256xbf16>
    %cst_17 = arith.constant dense<0.000000e+00> : vector<4x256xf32>
    %21 = tpu.matmul %2, %20, %cst_17 {dimension_numbers = #tpu.dot_dimension_numbers<[1], [0], [0], [1], [0, 0, 1, 1], [], []>} : vector<4x16xbf16>, vector<16x256xbf16>, vector<4x256xf32> -> vector<4x256xf32>
    %22 = vector.broadcast %5 : vector<4x1xf32> to vector<4x256xf32>
    %23 = arith.addf %21, %22 : vector<4x256xf32>
    %c0_18 = arith.constant 0 : index
    %c0_19 = arith.constant 0 : index
    %c0_20 = arith.constant 0 : index
    %24 = vector.load %arg9[%c0_18, %c0_19, %c0_20] : memref<2x4x256xf32, #tpu.memory_space<vmem>>, vector<1x4x256xf32>
    %25 = vector.shape_cast %24 : vector<1x4x256xf32> to vector<4x256xf32>
    %26 = vector.shape_cast %23 : vector<4x256xf32> to vector<1x4x256xf32>
    tpu.vector_store %arg9[%c0_18, %c0_19, %c0_20], %26 {strides = array<i32>} : memref<2x4x256xf32, #tpu.memory_space<vmem>>, vector<1x4x256xf32>,
    %c1 = arith.constant 1 : index
    %c0_21 = arith.constant 0 : index
    %c0_22 = arith.constant 0 : index
    %27 = vector.load %arg2[%c1, %c0_21, %c0_22] : memref<2x4x256xf32, #tpu.memory_space<vmem>>, vector<1x4x256xf32>
    %28 = vector.shape_cast %27 : vector<1x4x256xf32> to vector<4x256xf32>
    %29 = arith.truncf %28 : vector<4x256xf32> to vector<4x256xbf16>
    %cst_23 = arith.constant dense<0.000000e+00> : vector<8x256xf32>
    %30 = tpu.matmul %0, %29, %cst_23 {dimension_numbers = #tpu.dot_dimension_numbers<[1], [0], [0], [1], [0, 0, 1, 1], [], []>} : vector<8x4xbf16>, vector<4x256xbf16>, vector<8x256xf32> -> vector<8x256xf32>
    %31 = vector.broadcast %3 : vector<8x1xf32> to vector<8x256xf32>
    %32 = arith.addf %30, %31 : vector<8x256xf32>
    %cst_24 = arith.constant 0.000000e+00 : f32
    %33 = vector.broadcast %cst_24 : f32 to vector<8x256xf32>
    %34 = arith.maximumf %32, %33 : vector<8x256xf32>
    %35 = arith.truncf %34 : vector<8x256xf32> to vector<8x256xbf16>
    %cst_25 = arith.constant dense<0.000000e+00> : vector<16x256xf32>
    %36 = tpu.matmul %1, %35, %cst_25 {dimension_numbers = #tpu.dot_dimension_numbers<[1], [0], [0], [1], [0, 0, 1, 1], [], []>} : vector<16x8xbf16>, vector<8x256xbf16>, vector<16x256xf32> -> vector<16x256xf32>
    %37 = vector.broadcast %4 : vector<16x1xf32> to vector<16x256xf32>
    %38 = arith.addf %36, %37 : vector<16x256xf32>
    %cst_26 = arith.constant 0.000000e+00 : f32
    %39 = vector.broadcast %cst_26 : f32 to vector<16x256xf32>
    %40 = arith.maximumf %38, %39 : vector<16x256xf32>
    %41 = arith.truncf %40 : vector<16x256xf32> to vector<16x256xbf16>
    %cst_27 = arith.constant dense<0.000000e+00> : vector<4x256xf32>
    %42 = tpu.matmul %2, %41, %cst_27 {dimension_numbers = #tpu.dot_dimension_numbers<[1], [0], [0], [1], [0, 0, 1, 1], [], []>} : vector<4x16xbf16>, vector<16x256xbf16>, vector<4x256xf32> -> vector<4x256xf32>
    %43 = vector.broadcast %5 : vector<4x1xf32> to vector<4x256xf32>
    %44 = arith.addf %42, %43 : vector<4x256xf32>
    %c1_28 = arith.constant 1 : index
    %c0_29 = arith.constant 0 : index
    %c0_30 = arith.constant 0 : index
    %45 = vector.load %arg9[%c1_28, %c0_29, %c0_30] : memref<2x4x256xf32, #tpu.memory_space<vmem>>, vector<1x4x256xf32>
    %46 = vector.shape_cast %45 : vector<1x4x256xf32> to vector<4x256xf32>
    %47 = vector.shape_cast %44 : vector<4x256xf32> to vector<1x4x256xf32>
    tpu.vector_store %arg9[%c1_28, %c0_29, %c0_30], %47 {strides = array<i32>} : memref<2x4x256xf32, #tpu.memory_space<vmem>>, vector<1x4x256xf32>,
    return
  }
  func.func @transform_0(%arg0: i32, %arg1: i32) -> (i32, i32, i32) {
    %c0_i32 = arith.constant 0 : i32
    %c0_i32_0 = arith.constant 0 : i32
    return %arg0, %c0_i32, %arg1 : i32, i32, i32
  }
  func.func @transform_1(%arg0: i32, %arg1: i32) -> (i32, i32) {
    %c0_i32 = arith.constant 0 : i32
    %c0_i32_0 = arith.constant 0 : i32
    %c0_i32_1 = arith.constant 0 : i32
    return %c0_i32, %c0_i32_0 : i32, i32
  }
  func.func @transform_2(%arg0: i32, %arg1: i32) -> (i32, i32) {
    %c0_i32 = arith.constant 0 : i32
    %c0_i32_0 = arith.constant 0 : i32
    %c0_i32_1 = arith.constant 0 : i32
    return %c0_i32, %c0_i32_0 : i32, i32
  }
  func.func @transform_3(%arg0: i32, %arg1: i32) -> (i32, i32) {
    %c0_i32 = arith.constant 0 : i32
    %c0_i32_0 = arith.constant 0 : i32
    %c0_i32_1 = arith.constant 0 : i32
    return %c0_i32, %c0_i32_0 : i32, i32
  }
  func.func @transform_4(%arg0: i32, %arg1: i32) -> (i32, i32) {
    %c0_i32 = arith.constant 0 : i32
    %c0_i32_0 = arith.constant 0 : i32
    %c0_i32_1 = arith.constant 0 : i32
    return %c0_i32, %c0_i32_0 : i32, i32
  }
  func.func @transform_5(%arg0: i32, %arg1: i32) -> (i32, i32) {
    %c0_i32 = arith.constant 0 : i32
    %c0_i32_0 = arith.constant 0 : i32
    %c0_i32_1 = arith.constant 0 : i32
    return %c0_i32, %c0_i32_0 : i32, i32
  }
  func.func @transform_6(%arg0: i32, %arg1: i32) -> (i32, i32) {
    %c0_i32 = arith.constant 0 : i32
    %c0_i32_0 = arith.constant 0 : i32
    %c0_i32_1 = arith.constant 0 : i32
    return %c0_i32, %c0_i32_0 : i32, i32
  }
  func.func @transform_7(%arg0: i32, %arg1: i32) -> (i32, i32, i32) {
    %c0_i32 = arith.constant 0 : i32
    %c0_i32_0 = arith.constant 0 : i32
    return %arg0, %c0_i32, %arg1 : i32, i32, i32
  }
}

</mosaic_0001>

<llo_original>
// kernel: tpu_custom_call.1
$region0: #{tpu_custom_call.1}
  #allocation0 [shape = 'u32[]', space=smem, size = 0x4, offset = 0x4, fixed_abs, tag = 'smem constant byte address 0x4 - core index']
  #allocation1 [shape = 'u32[144,128]{1,0:T(1,128)}', space=vmem, size = 0x12000, scoped, tag = 'internal scratch']
  %s0 = inlined_call_operand.vmem [shape: f32[2,4,256], index: 0, kind: input, shape index: {}]
  %s1 = inlined_call_operand.vmem [shape: bf16[8,4], index: 1, kind: input, shape index: {}]
  %s2 = inlined_call_operand.vmem [shape: f32[8,1], index: 2, kind: input, shape index: {}]
  %s3 = inlined_call_operand.vmem [shape: bf16[16,8], index: 3, kind: input, shape index: {}]
  %s4 = inlined_call_operand.vmem [shape: f32[16,1], index: 4, kind: input, shape index: {}]
  %s5 = inlined_call_operand.vmem [shape: bf16[4,16], index: 5, kind: input, shape index: {}]
  %s6 = inlined_call_operand.vmem [shape: f32[4,1], index: 6, kind: input, shape index: {}]
  %s7 = inlined_call_operand.hbm [shape: f32[2,4,256], index: 7, kind: output, shape index: {}]
  %s8 = sld [smem:[#allocation0]]
  $region38: #{tpu_custom_call.1} parent=0
    _
  %s10 = ssub.s32 1, %s8
  %s11 = scalar_select 0, %s10, %s8
  $region1: #{tpu_custom_call.1} parent=0
    #allocation2 [shape = 'u8[8192]{0}', space=vmem, size = 0x2000, scoped, tag = 'output window, operand 0, single buffered']
    #allocation3 [shape = 's32[1]{0}', space=sflag, size = 0x4, scoped, tag = 'scoped memory for tpu_custom_call.1']
    %12 = vsyncpa [#allocation3], 0
    // Predicated region
    $region2: #{tpu_custom_call.1} parent=1 // pred_check
      _
    $region3: #{tpu_custom_call.1} parent=1 // pred_check_branch
      %14 = sbr.rel (0) target = $region5
    $region4: #{tpu_custom_call.1} parent=1 // pred_region
      _
    $region5: #{tpu_custom_call.1} parent=1 // pred_fallthru
      _
    // Predicated region
    $region6: #{tpu_custom_call.1} parent=1 // pred_check
      _
    $region7: #{tpu_custom_call.1} parent=1 // pred_check_branch
      %16 = sbr.rel (0) target = $region9
    $region8: #{tpu_custom_call.1} parent=1 // pred_region
      _
    $region9: #{tpu_custom_call.1} parent=1 // pred_fallthru
      _
    // Predicated region
    $region10: #{tpu_custom_call.1} parent=1 // pred_check
      _
    $region11: #{tpu_custom_call.1} parent=1 // pred_check_branch
      %18 = sbr.rel (0) target = $region13
    $region12: #{tpu_custom_call.1} parent=1 // pred_region
      _
    $region13: #{tpu_custom_call.1} parent=1 // pred_fallthru
      _
    // Predicated region
    $region14: #{tpu_custom_call.1} parent=1 // pred_check
      _
    $region15: #{tpu_custom_call.1} parent=1 // pred_check_branch
      %20 = sbr.rel (0) target = $region17
    $region16: #{tpu_custom_call.1} parent=1 // pred_region
      _
    $region17: #{tpu_custom_call.1} parent=1 // pred_fallthru
      _
    // Predicated region
    $region18: #{tpu_custom_call.1} parent=1 // pred_check
      _
    $region19: #{tpu_custom_call.1} parent=1 // pred_check_branch
      %22 = sbr.rel (0) target = $region21
    $region20: #{tpu_custom_call.1} parent=1 // pred_region
      _
    $region21: #{tpu_custom_call.1} parent=1 // pred_fallthru
      _
    // Predicated region
    $region22: #{tpu_custom_call.1} parent=1 // pred_check
      _
    $region23: #{tpu_custom_call.1} parent=1 // pred_check_branch
      %24 = sbr.rel (0) target = $region25
    $region24: #{tpu_custom_call.1} parent=1 // pred_region
      _
    $region25: #{tpu_custom_call.1} parent=1 // pred_fallthru
      _
    // Predicated region
    $region26: #{tpu_custom_call.1} parent=1 // pred_check
      _
    $region27: #{tpu_custom_call.1} parent=1 // pred_check_branch
      %26 = sbr.rel (0) target = $region29
    $region28: #{tpu_custom_call.1} parent=1 // pred_region
      _
    $region29: #{tpu_custom_call.1} parent=1 // pred_fallthru
      _
    %v28 = vld [vmem:[%s1] sm:$0xf]
    %v29 = vld [vmem:[%s3] sm:$0xf]
    %v30 = vld [vmem:[%s3 + $0x4] sm:$0xf]
    %v31 = vld [vmem:[%s5] sm:$0x3]
    %v32 = vld [vmem:[%s2] sm:$0xff]
    %v33 = vld [vmem:[%s4] sm:$0xff]
    %v34 = vld [vmem:[%s4 + $0x8] sm:$0xff]
    %v35 = vld [vmem:[%s6] sm:$0xf]
    %v36 = vld [vmem:[%s0] sm:$0xff]
    %v38 = vcombine.high %v36, %v36
    %v40 = vpack.c.bf16 %v36, %v36
    %v41 = vpack.c.bf16 %v38, %v38
    %43 = vset.pattern.permute.xlu0 0
    %44 = vperm.xlu0 %43, %v32
    %v45 = vpop.permute.xlu0 %44
    %vm47 = vcmask 31744
    %v49 = vsel %vm47, %v28, 0
    %vm51 = vcmask 1041408
    %v53 = vsel %vm51, %v40, 0
    %v56 = vsel %vm51, %v41, 0
    %58 = vmatprep.subr.bf16.mxu0 0
    %59 = vmatpush1.bf16.msra.mxu0 0
    %60 = vmatprep.subr.bf16.mxu0 0
    %61 = vmatpush1.bf16.msra.mxu0 0
    %62 = vmatprep.subr.bf16.mxu0 0
    %63 = vmatpush1.bf16.msra.mxu0 0
    %64 = vmatprep.subr.bf16.mxu0 0
    %65 = vmatpush1.bf16.msra.mxu0 0
    %66 = vmatprep.subr.bf16.mxu0 0
    %67 = vmatpush1.bf16.msra.mxu0 0
    %68 = vmatprep.subr.bf16.mxu0 0
    %69 = vmatpush1.bf16.msra.mxu0 0
    %70 = vmatprep.subr.bf16.mxu0 0
    %71 = vmatpush1.bf16.msra.mxu0 0
    %72 = vmatprep.subr.bf16.mxu0 %v56
    %73 = vmatpush1.bf16.msra.mxu0 %v53
    %74 = vmatprep.subr.bf16.mxu0 0
    %75 = vmatpush2.bf16.msra.mxu0 0
    %76 = vmatprep.subr.bf16.mxu0 0
    %77 = vmatpush2.bf16.msra.mxu0 0
    %78 = vmatprep.subr.bf16.mxu0 0
    %79 = vmatpush2.bf16.msra.mxu0 0
    %80 = vmatprep.subr.bf16.mxu0 0
    %81 = vmatpush2.bf16.msra.mxu0 0
    %82 = vmatprep.subr.bf16.mxu0 0
    %83 = vmatpush2.bf16.msra.mxu0 0
    %84 = vmatprep.subr.bf16.mxu0 0
    %85 = vmatpush2.bf16.msra.mxu0 0
    %86 = vmatprep.subr.bf16.mxu0 0
    %87 = vmatpush2.bf16.msra.mxu0 0
    %88 = vmatprep.subr.bf16.mxu0 0
    %89 = vmatpush2.bf16.msra.mxu0 0
    %90 = vmatprep.mubr.bf16.mxu0 0
    %91 = vmatmul.mubr.bf16.gmra.mxu0 %v49
    %v92 = vpop.f32.mrf.mxu0
    %v93 = vadd.f32 %v45, %v92
    %v94 = vpop.f32.mrf.mxu0
    %v95 = vadd.f32 %v45, %v94
    %v96 = vpop.f32.mrf.mxu0
    %v97 = vpop.f32.mrf.mxu0
    %98 = vdwg.mxu0
    %v99 = vmax.f32 %v93, 0.0
    %v100 = vmax.f32 %v95, 0.0
    %v101 = vpack.c.bf16 %v99, %v99
    %v102 = vpack.c.bf16 %v100, %v100
    %104 = vset.pattern.permute.xlu0 0
    %105 = vperm.xlu0 %104, %v33
    %v106 = vpop.permute.xlu0 %105
    %109 = vset.pattern.permute.xlu0 0
    %110 = vperm.xlu0 %109, %v34
    %v111 = vpop.permute.xlu0 %110
    %v115 = vunpack.c.l.b16 %v29
    %v116 = vunpack.c.l.b16 %v30
    %v117 = vpack.c.b16 %v116, %v115
    %vm118 = vcmask 64512
    %v120 = vsel %vm118, %v117, 0
    %vm122 = vcmask 1043456
    %v124 = vsel %vm122, %v101, 0
    %v127 = vsel %vm122, %v102, 0
    %129 = vmatprep.subr.bf16.mxu0 0
    %130 = vmatpush1.bf16.msra.mxu0 0
    %131 = vmatprep.subr.bf16.mxu0 0
    %132 = vmatpush1.bf16.msra.mxu0 0
    %133 = vmatprep.subr.bf16.mxu0 0
    %134 = vmatpush1.bf16.msra.mxu0 0
    %135 = vmatprep.subr.bf16.mxu0 0
    %136 = vmatpush1.bf16.msra.mxu0 0
    %137 = vmatprep.subr.bf16.mxu0 0
    %138 = vmatpush1.bf16.msra.mxu0 0
    %139 = vmatprep.subr.bf16.mxu0 0
    %140 = vmatpush1.bf16.msra.mxu0 0
    %141 = vmatprep.subr.bf16.mxu0 0
    %142 = vmatpush1.bf16.msra.mxu0 0
    %143 = vmatprep.subr.bf16.mxu0 %v127
    %144 = vmatpush1.bf16.msra.mxu0 %v124
    %145 = vmatprep.subr.bf16.mxu0 0
    %146 = vmatpush2.bf16.msra.mxu0 0
    %147 = vmatprep.subr.bf16.mxu0 0
    %148 = vmatpush2.bf16.msra.mxu0 0
    %149 = vmatprep.subr.bf16.mxu0 0
    %150 = vmatpush2.bf16.msra.mxu0 0
    %151 = vmatprep.subr.bf16.mxu0 0
    %152 = vmatpush2.bf16.msra.mxu0 0
    %153 = vmatprep.subr.bf16.mxu0 0
    %154 = vmatpush2.bf16.msra.mxu0 0
    %155 = vmatprep.subr.bf16.mxu0 0
    %156 = vmatpush2.bf16.msra.mxu0 0
    %157 = vmatprep.subr.bf16.mxu0 0
    %158 = vmatpush2.bf16.msra.mxu0 0
    %159 = vmatprep.subr.bf16.mxu0 0
    %160 = vmatpush2.bf16.msra.mxu0 0
    %161 = vmatprep.mubr.bf16.mxu0 0
    %162 = vmatmul.mubr.bf16.gmra.mxu0 %v120
    %v163 = vpop.f32.mrf.mxu0
    %v164 = vadd.f32 %v106, %v163
    %v165 = vpop.f32.mrf.mxu0
    %v166 = vadd.f32 %v106, %v165
    %v167 = vpop.f32.mrf.mxu0
    %v168 = vadd.f32 %v111, %v167
    %v169 = vpop.f32.mrf.mxu0
    %v170 = vadd.f32 %v111, %v169
    %171 = vdwg.mxu0
    %v172 = vmax.f32 %v164, 0.0
    %v173 = vmax.f32 %v166, 0.0
    %v174 = vmax.f32 %v168, 0.0
    %v175 = vmax.f32 %v170, 0.0
    %v176 = vpack.c.bf16 %v174, %v172
    %v177 = vpack.c.bf16 %v175, %v173
    %179 = vset.pattern.permute.xlu0 0
    %180 = vperm.xlu0 %179, %v35
    %v181 = vpop.permute.xlu0 %180
    %vm183 = vcmask 130048
    %v185 = vsel %vm183, %v31, 0
    %187 = vmatprep.subr.bf16.mxu0 0
    %188 = vmatpush1.bf16.msra.mxu0 0
    %189 = vmatprep.subr.bf16.mxu0 0
    %190 = vmatpush1.bf16.msra.mxu0 0
    %191 = vmatprep.subr.bf16.mxu0 0
    %192 = vmatpush1.bf16.msra.mxu0 0
    %193 = vmatprep.subr.bf16.mxu0 0
    %194 = vmatpush1.bf16.msra.mxu0 0
    %195 = vmatprep.subr.bf16.mxu0 0
    %196 = vmatpush1.bf16.msra.mxu0 0
    %197 = vmatprep.subr.bf16.mxu0 0
    %198 = vmatpush1.bf16.msra.mxu0 0
    %199 = vmatprep.subr.bf16.mxu0 0
    %200 = vmatpush1.bf16.msra.mxu0 0
    %201 = vmatprep.subr.bf16.mxu0 %v177
    %202 = vmatpush1.bf16.msra.mxu0 %v176
    %203 = vmatprep.subr.bf16.mxu0 0
    %204 = vmatpush2.bf16.msra.mxu0 0
    %205 = vmatprep.subr.bf16.mxu0 0
    %206 = vmatpush2.bf16.msra.mxu0 0
    %207 = vmatprep.subr.bf16.mxu0 0
    %208 = vmatpush2.bf16.msra.mxu0 0
    %209 = vmatprep.subr.bf16.mxu0 0
    %210 = vmatpush2.bf16.msra.mxu0 0
    %211 = vmatprep.subr.bf16.mxu0 0
    %212 = vmatpush2.bf16.msra.mxu0 0
    %213 = vmatprep.subr.bf16.mxu0 0
    %214 = vmatpush2.bf16.msra.mxu0 0
    %215 = vmatprep.subr.bf16.mxu0 0
    %216 = vmatpush2.bf16.msra.mxu0 0
    %217 = vmatprep.subr.bf16.mxu0 0
    %218 = vmatpush2.bf16.msra.mxu0 0
    %219 = vmatprep.mubr.bf16.mxu0 0
    %220 = vmatmul.mubr.bf16.gmra.mxu0 %v185
    %v221 = vpop.f32.mrf.mxu0
    %v222 = vadd.f32 %v181, %v221
    %v223 = vpop.f32.mrf.mxu0
    %v224 = vadd.f32 %v181, %v223
    %v225 = vpop.f32.mrf.mxu0
    %v226 = vpop.f32.mrf.mxu0
    %227 = vdwg.mxu0
    %v230 = vcombine.low %v222, %v224
    %232 = vst [vmem:[#allocation2] sm:$0xff] %v230
    %s233 = scalar_lea.vmem %s0, 8
    %v234 = vld [vmem:[%s233] sm:$0xff]
    %v236 = vcombine.high %v234, %v234
    %v238 = vpack.c.bf16 %v234, %v234
    %v239 = vpack.c.bf16 %v236, %v236
    %v241 = vsel %vm51, %v238, 0
    %v244 = vsel %vm51, %v239, 0
    %246 = vmatprep.subr.bf16.mxu0 0
    %247 = vmatpush1.bf16.msra.mxu0 0
    %248 = vmatprep.subr.bf16.mxu0 0
    %249 = vmatpush1.bf16.msra.mxu0 0
    %250 = vmatprep.subr.bf16.mxu0 0
    %251 = vmatpush1.bf16.msra.mxu0 0
    %252 = vmatprep.subr.bf16.mxu0 0
    %253 = vmatpush1.bf16.msra.mxu0 0
    %254 = vmatprep.subr.bf16.mxu0 0
    %255 = vmatpush1.bf16.msra.mxu0 0
    %256 = vmatprep.subr.bf16.mxu0 0
    %257 = vmatpush1.bf16.msra.mxu0 0
    %258 = vmatprep.subr.bf16.mxu0 0
    %259 = vmatpush1.bf16.msra.mxu0 0
    %260 = vmatprep.subr.bf16.mxu0 %v244
    %261 = vmatpush1.bf16.msra.mxu0 %v241
    %262 = vmatprep.subr.bf16.mxu0 0
    %263 = vmatpush2.bf16.msra.mxu0 0
    %264 = vmatprep.subr.bf16.mxu0 0
    %265 = vmatpush2.bf16.msra.mxu0 0
    %266 = vmatprep.subr.bf16.mxu0 0
    %267 = vmatpush2.bf16.msra.mxu0 0
    %268 = vmatprep.subr.bf16.mxu0 0
    %269 = vmatpush2.bf16.msra.mxu0 0
    %270 = vmatprep.subr.bf16.mxu0 0
    %271 = vmatpush2.bf16.msra.mxu0 0
    %272 = vmatprep.subr.bf16.mxu0 0
    %273 = vmatpush2.bf16.msra.mxu0 0
    %274 = vmatprep.subr.bf16.mxu0 0
    %275 = vmatpush2.bf16.msra.mxu0 0
    %276 = vmatprep.subr.bf16.mxu0 0
    %277 = vmatpush2.bf16.msra.mxu0 0
    %278 = vmatprep.mubr.bf16.mxu0 0
    %279 = vmatmul.mubr.bf16.gmra.mxu0 %v49
    %v280 = vpop.f32.mrf.mxu0
    %v281 = vadd.f32 %v45, %v280
    %v282 = vpop.f32.mrf.mxu0
    %v283 = vadd.f32 %v45, %v282
    %v284 = vpop.f32.mrf.mxu0
    %v285 = vpop.f32.mrf.mxu0
    %286 = vdwg.mxu0
    %v287 = vmax.f32 %v281, 0.0
    %v288 = vmax.f32 %v283, 0.0
    %v289 = vpack.c.bf16 %v287, %v287
    %v290 = vpack.c.bf16 %v288, %v288
    %v292 = vsel %vm122, %v289, 0
    %v295 = vsel %vm122, %v290, 0
    %297 = vmatprep.subr.bf16.mxu0 0
    %298 = vmatpush1.bf16.msra.mxu0 0
    %299 = vmatprep.subr.bf16.mxu0 0
    %300 = vmatpush1.bf16.msra.mxu0 0
    %301 = vmatprep.subr.bf16.mxu0 0
    %302 = vmatpush1.bf16.msra.mxu0 0
    %303 = vmatprep.subr.bf16.mxu0 0
    %304 = vmatpush1.bf16.msra.mxu0 0
    %305 = vmatprep.subr.bf16.mxu0 0
    %306 = vmatpush1.bf16.msra.mxu0 0
    %307 = vmatprep.subr.bf16.mxu0 0
    %308 = vmatpush1.bf16.msra.mxu0 0
    %309 = vmatprep.subr.bf16.mxu0 0
    %310 = vmatpush1.bf16.msra.mxu0 0
    %311 = vmatprep.subr.bf16.mxu0 %v295
    %312 = vmatpush1.bf16.msra.mxu0 %v292
    %313 = vmatprep.subr.bf16.mxu0 0
    %314 = vmatpush2.bf16.msra.mxu0 0
    %315 = vmatprep.subr.bf16.mxu0 0
    %316 = vmatpush2.bf16.msra.mxu0 0
    %317 = vmatprep.subr.bf16.mxu0 0
    %318 = vmatpush2.bf16.msra.mxu0 0
    %319 = vmatprep.subr.bf16.mxu0 0
    %320 = vmatpush2.bf16.msra.mxu0 0
    %321 = vmatprep.subr.bf16.mxu0 0
    %322 = vmatpush2.bf16.msra.mxu0 0
    %323 = vmatprep.subr.bf16.mxu0 0
    %324 = vmatpush2.bf16.msra.mxu0 0
    %325 = vmatprep.subr.bf16.mxu0 0
    %326 = vmatpush2.bf16.msra.mxu0 0
    %327 = vmatprep.subr.bf16.mxu0 0
    %328 = vmatpush2.bf16.msra.mxu0 0
    %329 = vmatprep.mubr.bf16.mxu0 0
    %330 = vmatmul.mubr.bf16.gmra.mxu0 %v120
    %v331 = vpop.f32.mrf.mxu0
    %v332 = vadd.f32 %v106, %v331
    %v333 = vpop.f32.mrf.mxu0
    %v334 = vadd.f32 %v106, %v333
    %v335 = vpop.f32.mrf.mxu0
    %v336 = vadd.f32 %v111, %v335
    %v337 = vpop.f32.mrf.mxu0
    %v338 = vadd.f32 %v111, %v337
    %339 = vdwg.mxu0
    %v340 = vmax.f32 %v332, 0.0
    %v341 = vmax.f32 %v334, 0.0
    %v342 = vmax.f32 %v336, 0.0
    %v343 = vmax.f32 %v338, 0.0
    %v344 = vpack.c.bf16 %v342, %v340
    %v345 = vpack.c.bf16 %v343, %v341
    %346 = vmatprep.subr.bf16.mxu0 0
    %347 = vmatpush1.bf16.msra.mxu0 0
    %348 = vmatprep.subr.bf16.mxu0 0
    %349 = vmatpush1.bf16.msra.mxu0 0
    %350 = vmatprep.subr.bf16.mxu0 0
    %351 = vmatpush1.bf16.msra.mxu0 0
    %352 = vmatprep.subr.bf16.mxu0 0
    %353 = vmatpush1.bf16.msra.mxu0 0
    %354 = vmatprep.subr.bf16.mxu0 0
    %355 = vmatpush1.bf16.msra.mxu0 0
    %356 = vmatprep.subr.bf16.mxu0 0
    %357 = vmatpush1.bf16.msra.mxu0 0
    %358 = vmatprep.subr.bf16.mxu0 0
    %359 = vmatpush1.bf16.msra.mxu0 0
    %360 = vmatprep.subr.bf16.mxu0 %v345
    %361 = vmatpush1.bf16.msra.mxu0 %v344
    %362 = vmatprep.subr.bf16.mxu0 0
    %363 = vmatpush2.bf16.msra.mxu0 0
    %364 = vmatprep.subr.bf16.mxu0 0
    %365 = vmatpush2.bf16.msra.mxu0 0
    %366 = vmatprep.subr.bf16.mxu0 0
    %367 = vmatpush2.bf16.msra.mxu0 0
    %368 = vmatprep.subr.bf16.mxu0 0
    %369 = vmatpush2.bf16.msra.mxu0 0
    %370 = vmatprep.subr.bf16.mxu0 0
    %371 = vmatpush2.bf16.msra.mxu0 0
    %372 = vmatprep.subr.bf16.mxu0 0
    %373 = vmatpush2.bf16.msra.mxu0 0
    %374 = vmatprep.subr.bf16.mxu0 0
    %375 = vmatpush2.bf16.msra.mxu0 0
    %376 = vmatprep.subr.bf16.mxu0 0
    %377 = vmatpush2.bf16.msra.mxu0 0
    %378 = vmatprep.mubr.bf16.mxu0 0
    %379 = vmatmul.mubr.bf16.gmra.mxu0 %v185
    %v380 = vpop.f32.mrf.mxu0
    %v381 = vadd.f32 %v181, %v380
    %v382 = vpop.f32.mrf.mxu0
    %v383 = vadd.f32 %v181, %v382
    %v384 = vpop.f32.mrf.mxu0
    %v385 = vpop.f32.mrf.mxu0
    %386 = vdwg.mxu0
    %v389 = vcombine.low %v381, %v383
    %s391 = scalar_lea.vmem [#allocation2], 8
    %392 = vst [vmem:[%s391] sm:$0xff] %v389
    // Predicated region
    $region30: #{tpu_custom_call.1} parent=1 // pred_check
      _
    $region31: #{tpu_custom_call.1} parent=1 // pred_check_branch
      %394 = sbr.rel (0) target = $region33
    $region32: #{tpu_custom_call.1} parent=1 // pred_region
      %s396 = ssub.s32 256, 256
      %397 = vsyncadd [#allocation3], %s396
      %s398 = sshll.u32 [#allocation2], 4
      %s399 = int_to_ptr.vmem [resolvable:$true] %s398
      %404 = dma.vmem_to_hbm [thread:$0]  %s399, 256, %s7, [#allocation3], 128, 128, 8
    $region33: #{tpu_custom_call.1} parent=1 // pred_fallthru
      _
    // Predicated region
    $region34: #{tpu_custom_call.1} parent=1 // pred_check
      _
    $region35: #{tpu_custom_call.1} parent=1 // pred_check_branch
      %406 = sbr.rel (0) target = $region37
    $region36: #{tpu_custom_call.1} parent=1 // pred_region
      %407 = dma.done [#allocation3], 256
    $region37: #{tpu_custom_call.1} parent=1 // pred_fallthru
      _
    %408 = vsyncpa [#allocation3], 1

</llo_original>
